<compile_context>
chip_gen: v7x
topology: tpu7x:2x2x1
jax: 0.10.0
libtpu: 0.0.40
codegen_flags: <defaults>
</compile_context>

<pallas_src>
import jax
import jax.numpy as jnp
import numpy as np
from jax import lax
from jax.experimental import pallas as pl
from jax.experimental.pallas import tpu as pltpu

EPS_ATTN = 1e-6            # LinearAttention eps
EPS_LN = 1e-5              # nn.LayerNorm default eps
VMEM_LIMIT = 48 * 1024 * 1024


def _elu_plus_one(x):
    # F.elu(x) + 1  ==  x + 1 for x > 0,  exp(x) for x <= 0
    return jnp.where(x > 0, x + 1.0, jnp.exp(x))


def _layernorm(x, gamma, beta):
    gamma = gamma.astype(jnp.float32)
    beta = beta.astype(jnp.float32)
    mean = jnp.mean(x, axis=-1, keepdims=True)
    var = jnp.mean(jnp.square(x - mean), axis=-1, keepdims=True)
    return (x - mean) * lax.rsqrt(var + EPS_LN) * gamma + beta


# --------------------------------------------------------------------------
# Pass 1: per-(batch, S-split) partial KV [C,C] and Ksum [1,C].
# grid = (N, P, S_steps/P); last axis is the reduction ("arbitrary"),
# accumulating directly into the f32 output blocks (resident across it).
# --------------------------------------------------------------------------
def loftr_kv_kernel(src_ref, wk_ref, wv_ref, kv_ref, ksum_ref):
    s = pl.program_id(2)

    @pl.when(s == 0)
    def _():
        kv_ref[...] = jnp.zeros_like(kv_ref)
        ksum_ref[...] = jnp.zeros_like(ksum_ref)

    mm_dtype = wk_ref.dtype
    src = src_ref[...].astype(mm_dtype)                       # [TS, C]

    k = jnp.dot(src, wk_ref[...], preferred_element_type=jnp.float32)
    v = jnp.dot(src, wv_ref[...], preferred_element_type=jnp.float32)
    k_feat = _elu_plus_one(k)                                 # [TS, C] f32

    # KV += K^T @ V, contracting over S without materializing a transpose.
    kv_ref[...] += lax.dot_general(
        k_feat.astype(mm_dtype), v.astype(mm_dtype),
        dimension_numbers=(((0,), (0,)), ((), ())),
        preferred_element_type=jnp.float32)
    ksum_ref[...] += jnp.sum(k_feat, axis=0, keepdims=True)   # [1, C]


# --------------------------------------------------------------------------
# Pass 2: per-(batch, L-tile) attention readout + merge + MLP + residual.
# grid = (N, L/TL); both axes fully parallel.
# --------------------------------------------------------------------------
def loftr_main_kernel(x_ref, kvaug_ref, wq_ref, wm_ref, w1x_ref, w1m_ref,
                      w2_ref, g1_ref, b1_ref, g2_ref, b2_ref, out_ref):
    C = x_ref.shape[-1]
    mm_dtype = wq_ref.dtype
    x_f32 = x_ref[...].astype(jnp.float32)
    x_mm = x_ref[...].astype(mm_dtype)                        # [TL, C]

    # --- q projection + feature map ---
    q = jnp.dot(x_mm, wq_ref[...], preferred_element_type=jnp.float32)
    q_feat = _elu_plus_one(q)                                 # [TL, C] f32

    # --- linear attention: fused numerator/denominator matmul ---
    # kvaug = [masked_KV | mask * Ksum_col] so one matmul yields both halves.
    z = jnp.dot(q_feat.astype(mm_dtype), kvaug_ref[...],
                preferred_element_type=jnp.float32)           # [TL, 2C]
    num = z[:, :C]
    denom = z[:, C:]
    msg = num / (denom + EPS_ATTN)                            # exact recip (f32)

    # --- merge projection + LayerNorm 1 ---
    msg = jnp.dot(msg.astype(mm_dtype), wm_ref[...],
                  preferred_element_type=jnp.float32)
    msg = _layernorm(msg, g1_ref[...], b1_ref[...])

    # --- MLP on concat([x, msg]) expressed as split matmuls (no lane concat) ---
    hmid = (jnp.dot(x_mm, w1x_ref[...], preferred_element_type=jnp.float32)
            + jnp.dot(msg.astype(mm_dtype), w1m_ref[...],
                      preferred_element_type=jnp.float32))    # [TL, 2C]
    hmid = jnp.maximum(hmid, 0.0)
    hout = jnp.dot(hmid.astype(mm_dtype), w2_ref[...],
                   preferred_element_type=jnp.float32)        # [TL, C]
    msg = _layernorm(hout, g2_ref[...], b2_ref[...])

    # --- residual ---
    out_ref[...] = (x_f32 + msg).astype(out_ref.dtype)


def _pick_tile(total, target):
    """Largest multiple-of-8 divisor of `total` that is <= target.

    Falls back to the full dimension (always a legal block dim) if no such
    divisor exists — never returns an awkward non-multiple-of-8 tile.
    """
    if total <= target:
        return total
    t = (target // 8) * 8
    while t >= 8:
        if total % t == 0:
            return t
        t -= 8
    return total


def loftr_encoder_layer(x, source, params, *, tl=1200, ts=1200,
                        compute_dtype=jnp.bfloat16):
    N, L, C = x.shape
    S = source.shape[1]
    nhead = params["nhead"]
    head_dim = C // nhead

    TL = _pick_tile(L, tl)
    TS = _pick_tile(S, ts)
    s_steps = S // TS
    # Split the S reduction across two partials when batch alone can't keep
    # both v7x TensorCores busy.
    P = 2 if (N == 1 and s_steps % 2 == 0) else 1
    spp = s_steps // P

    cd = compute_dtype
    # All matmul weights pre-cast to the compute dtype (bf16 MXU path).
    wq = params["wq"].astype(cd)
    wk = params["wk"].astype(cd)
    wv = params["wv"].astype(cd)
    wm = params["wm"].astype(cd)
    w1 = params["w1"]                    # [2C, 2C], rows ordered (x, msg)
    w1_x = w1[:C, :].astype(cd)          # [C, 2C]
    w1_m = w1[C:, :].astype(cd)          # [C, 2C]
    w2 = params["w2"].astype(cd)         # [2C, C]

    # Block-diagonal (per-head) [C, C] mask, built once in the wrapper.
    head_ids = jnp.arange(C) // head_dim
    mask = (head_ids[:, None] == head_ids[None, :]).astype(jnp.float32)

    # ---------------- pass 1: partial KV / Ksum ----------------
    kv, ksum = pl.pallas_call(
        loftr_kv_kernel,
        out_shape=(jax.ShapeDtypeStruct((N, P, C, C), jnp.float32),
                   jax.ShapeDtypeStruct((N, P, 1, C), jnp.float32)),
        grid_spec=pltpu.PrefetchScalarGridSpec(
            num_scalar_prefetch=0,
            grid=(N, P, spp),
            in_specs=[
                pl.BlockSpec((pl.Squeezed(), TS, C),
                             lambda n, p, s, _spp=spp: (n, p * _spp + s, 0)),
                pl.BlockSpec((C, C), lambda n, p, s: (0, 0)),   # Wk
                pl.BlockSpec((C, C), lambda n, p, s: (0, 0)),   # Wv
            ],
            out_specs=(
                pl.BlockSpec((pl.Squeezed(), pl.Squeezed(), C, C),
                             lambda n, p, s: (n, p, 0, 0)),     # KV partial
                pl.BlockSpec((pl.Squeezed(), pl.Squeezed(), 1, C),
                             lambda n, p, s: (n, p, 0, 0)),     # Ksum partial
            ),
        ),
        compiler_params=pltpu.CompilerParams(
            dimension_semantics=("parallel", "parallel", "arbitrary"),
            vmem_limit_bytes=VMEM_LIMIT),
    )(source, wk, wv)

    # ---------------- wrapper glue: reduce partials, mask, augment ----------
    kv = kv.sum(axis=1)                                   # [N, C, C] f32
    ksum = ksum.sum(axis=1)                                # [N, 1, C] f32
    kv_masked = kv * mask                                  # block-diagonal KV
    ksum_col = jnp.swapaxes(ksum, 1, 2)                    # [N, C, 1]
    aug_right = mask * ksum_col                            # [N, C, C]
    kv_aug = jnp.concatenate([kv_masked, aug_right], axis=-1).astype(cd)

    # ---------------- pass 2: per-L-tile attention + MLP ----------------
    def wspec(shape):
        nd = len(shape)
        return pl.BlockSpec(shape, lambda n, i, _nd=nd: (0,) * _nd)

    out = pl.pallas_call(
        loftr_main_kernel,
        out_shape=jax.ShapeDtypeStruct((N, L, C), x.dtype),
        grid_spec=pltpu.PrefetchScalarGridSpec(
            num_scalar_prefetch=0,
            grid=(N, L // TL),
            in_specs=[
                pl.BlockSpec((pl.Squeezed(), TL, C), lambda n, i: (n, i, 0)),   # x
                pl.BlockSpec((pl.Squeezed(), C, 2 * C), lambda n, i: (n, 0, 0)),  # KV_aug
                wspec((C, C)),          # Wq
                wspec((C, C)),          # Wmerge
                wspec((C, 2 * C)),      # W1 (x rows)
                wspec((C, 2 * C)),      # W1 (msg rows)
                wspec((2 * C, C)),      # W2
                wspec((1, C)),          # norm1 gamma
                wspec((1, C)),          # norm1 beta
                wspec((1, C)),          # norm2 gamma
                wspec((1, C)),          # norm2 beta
            ],
            out_specs=pl.BlockSpec((pl.Squeezed(), TL, C), lambda n, i: (n, i, 0)),
        ),
        compiler_params=pltpu.CompilerParams(
            dimension_semantics=("parallel", "parallel"),
            vmem_limit_bytes=VMEM_LIMIT),
    )(x, kv_aug, wq, wm, w1_x, w1_m, w2,
      params["g1"], params["b1"], params["g2"], params["b2"])

    return out


def reference(x, source, params):
    """Pure-JAX reference mirroring the PyTorch forward exactly (full f32)."""
    with jax.default_matmul_precision("highest"):
        N, L, C = x.shape
        S = source.shape[1]
        H = params["nhead"]
        D = C // H

        q = (x @ params["wq"]).reshape(N, L, H, D)
        k = (source @ params["wk"]).reshape(N, S, H, D)
        v = (source @ params["wv"]).reshape(N, S, H, D)

        Q = _elu_plus_one(q)
        K = _elu_plus_one(k)
        Vs = v / S
        KV = jnp.einsum("nshd,nshv->nhdv", K, Vs)
        Z = 1.0 / (jnp.einsum("nlhd,nhd->nlh", Q, K.sum(axis=1)) + EPS_ATTN)
        msg = jnp.einsum("nlhd,nhdv,nlh->nlhv", Q, KV, Z) * S
        msg = msg.reshape(N, L, C) @ params["wm"]
        msg = _layernorm(msg, params["g1"], params["b1"])
        h = jnp.concatenate([x, msg], axis=-1)
        h = jnp.maximum(h @ params["w1"], 0.0) @ params["w2"]
        msg = _layernorm(h, params["g2"], params["b2"])
        return x + msg


if __name__ == "__main__":
    # Small shapes: batch N=2, seq L=S=8, d_model=32, nhead=4 (head_dim=8).
    N, L, S, C, H = 2, 8, 8, 32, 4

    key = jax.random.PRNGKey(0)
    ks = jax.random.split(key, 12)

    x = jax.random.normal(ks[0], (N, L, C), jnp.float32)
    source = jax.random.normal(ks[1], (N, S, C), jnp.float32)

    scale = 0.1
    params = {
        "nhead": H,
        # all linear weights stored [in, out]  (y = x @ W)
        "wq": scale * jax.random.normal(ks[2], (C, C), jnp.float32),
        "wk": scale * jax.random.normal(ks[3], (C, C), jnp.float32),
        "wv": scale * jax.random.normal(ks[4], (C, C), jnp.float32),
        "wm": scale * jax.random.normal(ks[5], (C, C), jnp.float32),
        "w1": scale * jax.random.normal(ks[6], (2 * C, 2 * C), jnp.float32),
        "w2": scale * jax.random.normal(ks[7], (2 * C, C), jnp.float32),
        "g1": 1.0 + scale * jax.random.normal(ks[8], (1, C), jnp.float32),
        "b1": scale * jax.random.normal(ks[9], (1, C), jnp.float32),
        "g2": 1.0 + scale * jax.random.normal(ks[10], (1, C), jnp.float32),
        "b2": scale * jax.random.normal(ks[11], (1, C), jnp.float32),
    }

    ref = jax.block_until_ready(reference(x, source, params))

    # 1) f32 compute path: tight numerical check of the kernel math
    #    (exact attention reciprocal; the reference's /S,*S pair cancels).
    out_f32 = jax.block_until_ready(
        loftr_encoder_layer(x, source, params, compute_dtype=jnp.float32))
    np.testing.assert_allclose(np.asarray(out_f32), np.asarray(ref),
                               rtol=2e-3, atol=2e-3)

    # 2) bf16 production path (default): exercises the bf16 MXU pipeline.
    #    bf16 operand rounding -> validate aggregate relative error instead
    #    of per-element tolerance.
    out_bf16 = jax.block_until_ready(
        loftr_encoder_layer(x, source, params, compute_dtype=jnp.bfloat16))
    diff = np.asarray(out_bf16, np.float64) - np.asarray(ref, np.float64)
    rel_err = np.linalg.norm(diff) / np.linalg.norm(np.asarray(ref, np.float64))
    assert rel_err < 5e-2, f"bf16 path relative error too high: {rel_err}"

    print("KERNEL_OK")
</pallas_src>

<mosaic_0001>
module attributes {stable_mosaic.version = 11 : i64} {
  func.func @loftr_kv_kernel(%arg0: i32, %arg1: i32, %arg2: i32, %arg3: memref<1x8x32xf32, #tpu.memory_space<vmem>>, %arg4: memref<32x32xf32, #tpu.memory_space<vmem>>, %arg5: memref<32x32xf32, #tpu.memory_space<vmem>>, %arg6: memref<1x1x32x32xf32, #tpu.memory_space<vmem>>, %arg7: memref<1x1x1x32xf32, #tpu.memory_space<vmem>>) attributes {dimension_semantics = [#tpu.dimension_semantics<parallel>, #tpu.dimension_semantics<parallel>, #tpu.dimension_semantics<arbitrary>], iteration_bounds = array<i64: 2, 1, 1>, scalar_prefetch = 0 : i64, scratch_operands = 0 : i64, tpu.core_type = #tpu.core_type<tc>, window_params = [{transform_indices = @transform_0, window_bounds = array<i64: 1, 8, 32>}, {pipeline_mode = #tpu.pipeline_mode<synchronous>, transform_indices = @transform_1, window_bounds = array<i64: 32, 32>}, {pipeline_mode = #tpu.pipeline_mode<synchronous>, transform_indices = @transform_2, window_bounds = array<i64: 32, 32>}, {transform_indices = @transform_3, window_bounds = array<i64: 1, 1, 32, 32>}, {transform_indices = @transform_4, window_bounds = array<i64: 1, 1, 1, 32>}]} {
    %c0_i32 = arith.constant 0 : i32
    %0 = arith.cmpi eq, %arg2, %c0_i32 : i32
    %1 = arith.extui %0 : i1 to i32
    %c0_i32_0 = arith.constant 0 : i32
    %2 = arith.cmpi ne, %1, %c0_i32_0 : i32
    scf.if %2 {
      %cst_28 = arith.constant 0.000000e+00 : f32
      %30 = vector.broadcast %cst_28 : f32 to vector<32x32xf32>
      %c0_29 = arith.constant 0 : index
      %c0_30 = arith.constant 0 : index
      %c0_31 = arith.constant 0 : index
      %c0_32 = arith.constant 0 : index
      %31 = vector.load %arg6[%c0_29, %c0_30, %c0_31, %c0_32] : memref<1x1x32x32xf32, #tpu.memory_space<vmem>>, vector<1x1x32x32xf32>
      %32 = vector.shape_cast %31 : vector<1x1x32x32xf32> to vector<32x32xf32>
      %33 = vector.shape_cast %30 : vector<32x32xf32> to vector<1x1x32x32xf32>
      tpu.vector_store %arg6[%c0_29, %c0_30, %c0_31, %c0_32], %33 {strides = array<i32>} : memref<1x1x32x32xf32, #tpu.memory_space<vmem>>, vector<1x1x32x32xf32>,
      %cst_33 = arith.constant 0.000000e+00 : f32
      %34 = vector.broadcast %cst_33 : f32 to vector<1x32xf32>
      %c0_34 = arith.constant 0 : index
      %c0_35 = arith.constant 0 : index
      %c0_36 = arith.constant 0 : index
      %c0_37 = arith.constant 0 : index
      %35 = vector.load %arg7[%c0_34, %c0_35, %c0_36, %c0_37] : memref<1x1x1x32xf32, #tpu.memory_space<vmem>>, vector<1x1x1x32xf32>
      %36 = vector.shape_cast %35 : vector<1x1x1x32xf32> to vector<1x32xf32>
      %37 = vector.shape_cast %34 : vector<1x32xf32> to vector<1x1x1x32xf32>
      tpu.vector_store %arg7[%c0_34, %c0_35, %c0_36, %c0_37], %37 {strides = array<i32>} : memref<1x1x1x32xf32, #tpu.memory_space<vmem>>, vector<1x1x1x32xf32>,
    } else {
    }
    %c0 = arith.constant 0 : index
    %c0_1 = arith.constant 0 : index
    %c0_2 = arith.constant 0 : index
    %3 = vector.load %arg3[%c0, %c0_1, %c0_2] : memref<1x8x32xf32, #tpu.memory_space<vmem>>, vector<1x8x32xf32>
    %4 = vector.shape_cast %3 : vector<1x8x32xf32> to vector<8x32xf32>
    %c0_3 = arith.constant 0 : index
    %c0_4 = arith.constant 0 : index
    %5 = vector.load %arg4[%c0_3, %c0_4] : memref<32x32xf32, #tpu.memory_space<vmem>>, vector<32x32xf32>
    %cst = arith.constant dense<0.000000e+00> : vector<8x32xf32>
    %6 = tpu.matmul %4, %5, %cst {dimension_numbers = #tpu.dot_dimension_numbers<[1], [0], [0], [1], [0, 0, 1, 1], [], []>} : vector<8x32xf32>, vector<32x32xf32>, vector<8x32xf32> -> vector<8x32xf32>
    %c0_5 = arith.constant 0 : index
    %c0_6 = arith.constant 0 : index
    %7 = vector.load %arg5[%c0_5, %c0_6] : memref<32x32xf32, #tpu.memory_space<vmem>>, vector<32x32xf32>
    %cst_7 = arith.constant dense<0.000000e+00> : vector<8x32xf32>
    %8 = tpu.matmul %4, %7, %cst_7 {dimension_numbers = #tpu.dot_dimension_numbers<[1], [0], [0], [1], [0, 0, 1, 1], [], []>} : vector<8x32xf32>, vector<32x32xf32>, vector<8x32xf32> -> vector<8x32xf32>
    %cst_8 = arith.constant 0.000000e+00 : f32
    %9 = vector.broadcast %cst_8 : f32 to vector<8x32xf32>
    %10 = arith.cmpf ogt, %6, %9 : vector<8x32xf32>
    %cst_9 = arith.constant 1.000000e+00 : f32
    %11 = vector.broadcast %cst_9 : f32 to vector<8x32xf32>
    %12 = arith.addf %6, %11 : vector<8x32xf32>
    %13 = math.exp %6 : vector<8x32xf32>
    %14 = arith.select %10, %12, %13 : vector<8x32xi1>, vector<8x32xf32>
    %c0_10 = arith.constant 0 : index
    %c0_11 = arith.constant 0 : index
    %c0_12 = arith.constant 0 : index
    %c0_13 = arith.constant 0 : index
    %15 = vector.load %arg6[%c0_10, %c0_11, %c0_12, %c0_13] : memref<1x1x32x32xf32, #tpu.memory_space<vmem>>, vector<1x1x32x32xf32>
    %16 = vector.shape_cast %15 : vector<1x1x32x32xf32> to vector<32x32xf32>
    %cst_14 = arith.constant dense<0.000000e+00> : vector<32x32xf32>
    %17 = tpu.matmul %14, %8, %cst_14 {dimension_numbers = #tpu.dot_dimension_numbers<[0], [0], [1], [1], [0, 1, 1, 1], [], []>} : vector<8x32xf32>, vector<8x32xf32>, vector<32x32xf32> -> vector<32x32xf32>
    %18 = arith.addf %16, %17 : vector<32x32xf32>
    %c0_15 = arith.constant 0 : index
    %c0_16 = arith.constant 0 : index
    %c0_17 = arith.constant 0 : index
    %c0_18 = arith.constant 0 : index
    %19 = vector.load %arg6[%c0_15, %c0_16, %c0_17, %c0_18] : memref<1x1x32x32xf32, #tpu.memory_space<vmem>>, vector<1x1x32x32xf32>
    %20 = vector.shape_cast %19 : vector<1x1x32x32xf32> to vector<32x32xf32>
    %21 = vector.shape_cast %18 : vector<32x32xf32> to vector<1x1x32x32xf32>
    tpu.vector_store %arg6[%c0_15, %c0_16, %c0_17, %c0_18], %21 {strides = array<i32>} : memref<1x1x32x32xf32, #tpu.memory_space<vmem>>, vector<1x1x32x32xf32>,
    %c0_19 = arith.constant 0 : index
    %c0_20 = arith.constant 0 : index
    %c0_21 = arith.constant 0 : index
    %c0_22 = arith.constant 0 : index
    %22 = vector.load %arg7[%c0_19, %c0_20, %c0_21, %c0_22] : memref<1x1x1x32xf32, #tpu.memory_space<vmem>>, vector<1x1x1x32xf32>
    %23 = vector.shape_cast %22 : vector<1x1x1x32xf32> to vector<1x32xf32>
    %cst_23 = arith.constant dense<0.000000e+00> : vector<32xf32>
    %24 = vector.multi_reduction <add>, %14, %cst_23 [0] : vector<8x32xf32> to vector<32xf32>
    %25 = vector.shape_cast %24 : vector<32xf32> to vector<1x32xf32>
    %26 = arith.addf %23, %25 : vector<1x32xf32>
    %c0_24 = arith.constant 0 : index
    %c0_25 = arith.constant 0 : index
    %c0_26 = arith.constant 0 : index
    %c0_27 = arith.constant 0 : index
    %27 = vector.load %arg7[%c0_24, %c0_25, %c0_26, %c0_27] : memref<1x1x1x32xf32, #tpu.memory_space<vmem>>, vector<1x1x1x32xf32>
    %28 = vector.shape_cast %27 : vector<1x1x1x32xf32> to vector<1x32xf32>
    %29 = vector.shape_cast %26 : vector<1x32xf32> to vector<1x1x1x32xf32>
    tpu.vector_store %arg7[%c0_24, %c0_25, %c0_26, %c0_27], %29 {strides = array<i32>} : memref<1x1x1x32xf32, #tpu.memory_space<vmem>>, vector<1x1x1x32xf32>,
    return
  }
  func.func @transform_0(%arg0: i32, %arg1: i32, %arg2: i32) -> (i32, i32, i32) {
    %c1_i32 = arith.constant 1 : i32
    %0 = arith.muli %arg1, %c1_i32 : i32
    %1 = arith.addi %0, %arg2 : i32
    %c0_i32 = arith.constant 0 : i32
    %c0_i32_0 = arith.constant 0 : i32
    return %arg0, %1, %c0_i32 : i32, i32, i32
  }
  func.func @transform_1(%arg0: i32, %arg1: i32, %arg2: i32) -> (i32, i32) {
    %c0_i32 = arith.constant 0 : i32
    %c0_i32_0 = arith.constant 0 : i32
    %c0_i32_1 = arith.constant 0 : i32
    return %c0_i32, %c0_i32_0 : i32, i32
  }
  func.func @transform_2(%arg0: i32, %arg1: i32, %arg2: i32) -> (i32, i32) {
    %c0_i32 = arith.constant 0 : i32
    %c0_i32_0 = arith.constant 0 : i32
    %c0_i32_1 = arith.constant 0 : i32
    return %c0_i32, %c0_i32_0 : i32, i32
  }
  func.func @transform_3(%arg0: i32, %arg1: i32, %arg2: i32) -> (i32, i32, i32, i32) {
    %c0_i32 = arith.constant 0 : i32
    %c0_i32_0 = arith.constant 0 : i32
    %c0_i32_1 = arith.constant 0 : i32
    return %arg0, %arg1, %c0_i32, %c0_i32_0 : i32, i32, i32, i32
  }
  func.func @transform_4(%arg0: i32, %arg1: i32, %arg2: i32) -> (i32, i32, i32, i32) {
    %c0_i32 = arith.constant 0 : i32
    %c0_i32_0 = arith.constant 0 : i32
    %c0_i32_1 = arith.constant 0 : i32
    return %arg0, %arg1, %c0_i32, %c0_i32_0 : i32, i32, i32, i32
  }
}

</mosaic_0001>

<llo_original>
// kernel: tpu_custom_call.1
$region0: #{tpu_custom_call.1}
  #allocation0 [shape = 'u32[]', space=smem, size = 0x4, offset = 0x4, fixed_abs, tag = 'smem constant byte address 0x4 - core index']
  #allocation1 [shape = 'u32[144,128]{1,0:T(1,128)}', space=vmem, size = 0x12000, scoped, tag = 'internal scratch']
  %s0 = inlined_call_operand.hbm [shape: f32[2,8,32], index: 0, kind: input, shape index: {}]
  %s1 = inlined_call_operand.hbm [shape: f32[32,32], index: 1, kind: input, shape index: {}]
  %s2 = inlined_call_operand.hbm [shape: f32[32,32], index: 2, kind: input, shape index: {}]
  %s3 = inlined_call_operand.hbm [shape: f32[2,1,32,32], index: 3, kind: output, shape index: {0}]
  %s4 = inlined_call_operand.hbm [shape: f32[2,1,1,32], index: 4, kind: output, shape index: {1}]
  %5 = xla_tuple %s3, %s4
  %s6 = sld [smem:[#allocation0]]
  $region69: #{tpu_custom_call.1} parent=0
    _
  %s8 = ssub.s32 1, %s6
  %s9 = scalar_select 0, %s8, %s6
  $region1: #{tpu_custom_call.1} parent=0
    #allocation2 [shape = 'u8[8192]{0}', space=vmem, size = 0x2000, scoped, tag = 'input window, operand 0']
    #allocation3 [shape = 's32[2]{0}', space=sflag, size = 0x8, scoped, tag = 'scoped memory for tpu_custom_call.1']
    #allocation4 [shape = 's32[2]{0}', space=sflag, size = 0x8, scoped, tag = 'scoped memory for tpu_custom_call.1']
    #allocation5 [shape = 'u8[16384]{0}', space=vmem, size = 0x4000, scoped, tag = 'input window, operand 1, single buffered']
    #allocation6 [shape = 's32[1]{0}', space=sflag, size = 0x4, scoped, tag = 'scoped memory for tpu_custom_call.1']
    #allocation7 [shape = 'u8[16384]{0}', space=vmem, size = 0x4000, scoped, tag = 'input window, operand 2, single buffered']
    #allocation8 [shape = 'u8[32768]{0}', space=vmem, size = 0x8000, scoped, tag = 'output window, operand 0']
    #allocation9 [shape = 'u8[1024]{0}', space=vmem, size = 0x400, scoped, tag = 'output window, operand 1']
    #allocation10 [shape = 's32[2]{0}', space=sflag, size = 0x8, scoped, tag = 'scoped memory for tpu_custom_call.1']
    %10 = vsyncpa [#allocation3], 0
    %s11 = scalar_lea.sflag [#allocation3], 1
    %12 = vsyncpa %s11, 0
    %13 = vsyncpa [#allocation6], 0
    %14 = vsyncpa [#allocation4], 0
    %s15 = scalar_lea.sflag [#allocation4], 1
    %16 = vsyncpa %s15, 0
    %17 = vsyncpa [#allocation10], 0
    %s18 = scalar_lea.sflag [#allocation10], 1
    %19 = vsyncpa %s18, 0
    loop: start=0, step=1, limit=4
    $region2: #{tpu_custom_call.1} parent=1 // loop_pre_header
      _
    $region3: #{tpu_custom_call.1} parent=1 // loop_header
      %s21 = sphi 0, %s25
      %p22 = scmp.ge.s32.totalorder %s21, 4
      %s28 = sphi 0, %s47
      %s29 = sphi 0, %s43
      %s30 = sphi 0, %s39
      %s31 = sphi 0, %s28
      %s32 = sphi 0, %s29
      %s33 = sphi 0, %s30
      %s34 = sphi 0, %s31
      %s35 = sphi 0, %s32
      %s36 = sphi 0, %s33
      %s54 = sphi 0, %s56
      %s57 = sphi 0, %s54
      %s58 = sphi 0, %s57
      %s74 = sphi 0, %s58
      %s78 = sphi 0, %s78
      %s80 = sphi 0, %s78
      %s81 = sphi 0, %s80
      %s95 = sphi 0, %s81
      %s99 = sphi 0, %s99
      %s101 = sphi 0, %s99
      %s102 = sphi 0, %s101
      %s116 = sphi 0, %s102
      %s124 = sphi 0, %s126
      %s127 = sphi 0, %s124
      %s128 = sphi 0, %s127
      %s144 = sphi 0, %s128
      %s152 = sphi 0, %s154
      %s155 = sphi 0, %s152
      %s156 = sphi 0, %s155
      %s172 = sphi 0, %s156
    $region4: #{tpu_custom_call.1} parent=1 // loop_header_branch
      %24 = sbr.rel (%p22) target = $region8
    $region5: #{tpu_custom_call.1} parent=1 // loop_body
      %s26 = ssub.s32 %s21, 1
      %s27 = ssub.s32 %s21, 2
      %s37 = sadd.s32 1, %s30
      %p38 = scmp.ge.s32.totalorder %s37, 1
      %s39 = scalar_select %p38, 0, %s37
      %s40 = sadd.s32 1, %s29
      %s41 = scalar_select %p38, %s40, %s29
      %p42 = scmp.ge.s32.totalorder %s41, 1
      %s43 = scalar_select %p42, 0, %s41
      %s44 = sadd.s32 1, %s28
      %s45 = scalar_select %p42, %s44, %s28
      %p46 = scmp.ge.s32.totalorder %s45, 2
      %s47 = scalar_select %p46, 0, %s45
      %s48 = sadd.s32 %s29, %s30
      %s49 = sadd.s32 %s43, %s39
      %s50 = ssub.s32 %s28, %s47
      %s51 = ssub.s32 %s48, %s49
      %s52 = sor.u32 %s50, %s51
      %p53 = scmp.eq.s32.totalorder %s52, 0
      %s55 = sadd.s32 %s54, 1
      %s56 = scalar_select %p53, %s54, %s55
      %p59 = pneg %p53
      %p60 = scmp.eq.s32.totalorder %s21, 1
      %p61 = por %p59, %p60
      %p62 = scmp.ne.s32.totalorder %s54, %s57
      %p63 = scmp.eq.s32.totalorder %s21, 0
      %p64 = por %p62, %p63
      %p65 = scmp.ne.s32.totalorder %s54, %s57
      %p66 = scmp.eq.s32.totalorder %s26, 1
      %p67 = por %p65, %p66
      %p68 = scmp.ne.s32.totalorder %s57, %s58
      %p69 = scmp.eq.s32.totalorder %s26, 0
      %p70 = por %p68, %p69
      %p71 = scmp.ne.s32.totalorder %s57, %s58
      %p72 = scmp.eq.s32.totalorder %s27, 1
      %p73 = por %p71, %p72
      %p75 = scmp.ne.s32.totalorder %s58, %s74
      %p76 = scmp.eq.s32.totalorder %s27, 0
      %p77 = por %p75, %p76
      %s79 = sadd.s32 %s78, 1
      %p82 = scmp.eq.s32.totalorder %s21, 1
      %p83 = scmp.ne.s32.totalorder %s78, %s80
      %p84 = scmp.eq.s32.totalorder %s21, 0
      %p85 = por %p83, %p84
      %p86 = scmp.ne.s32.totalorder %s78, %s80
      %p87 = scmp.eq.s32.totalorder %s26, 1
      %p88 = por %p86, %p87
      %p89 = scmp.ne.s32.totalorder %s80, %s81
      %p90 = scmp.eq.s32.totalorder %s26, 0
      %p91 = por %p89, %p90
      %p92 = scmp.ne.s32.totalorder %s80, %s81
      %p93 = scmp.eq.s32.totalorder %s27, 1
      %p94 = por %p92, %p93
      %p96 = scmp.ne.s32.totalorder %s81, %s95
      %p97 = scmp.eq.s32.totalorder %s27, 0
      %p98 = por %p96, %p97
      %s100 = sadd.s32 %s99, 1
      %p103 = scmp.eq.s32.totalorder %s21, 1
      %p104 = scmp.ne.s32.totalorder %s99, %s101
      %p105 = scmp.eq.s32.totalorder %s21, 0
      %p106 = por %p104, %p105
      %p107 = scmp.ne.s32.totalorder %s99, %s101
      %p108 = scmp.eq.s32.totalorder %s26, 1
      %p109 = por %p107, %p108
      %p110 = scmp.ne.s32.totalorder %s101, %s102
      %p111 = scmp.eq.s32.totalorder %s26, 0
      %p112 = por %p110, %p111
      %p113 = scmp.ne.s32.totalorder %s101, %s102
      %p114 = scmp.eq.s32.totalorder %s27, 1
      %p115 = por %p113, %p114
      %p117 = scmp.ne.s32.totalorder %s102, %s116
      %p118 = scmp.eq.s32.totalorder %s27, 0
      %p119 = por %p117, %p118
      %s120 = ssub.s32 %s28, %s47
      %s121 = ssub.s32 %s29, %s43
      %s122 = sor.u32 %s120, %s121
      %p123 = scmp.eq.s32.totalorder %s122, 0
      %s125 = sadd.s32 %s124, 1
      %s126 = scalar_select %p123, %s124, %s125
      %p129 = pneg %p123
      %p130 = scmp.eq.s32.totalorder %s21, 1
      %p131 = por %p129, %p130
      %p132 = scmp.ne.s32.totalorder %s124, %s127
      %p133 = scmp.eq.s32.totalorder %s21, 0
      %p134 = por %p132, %p133
      %p135 = scmp.ne.s32.totalorder %s124, %s127
      %p136 = scmp.eq.s32.totalorder %s26, 1
      %p137 = por %p135, %p136
      %p138 = scmp.ne.s32.totalorder %s127, %s128
      %p139 = scmp.eq.s32.totalorder %s26, 0
      %p140 = por %p138, %p139
      %p141 = scmp.ne.s32.totalorder %s127, %s128
      %p142 = scmp.eq.s32.totalorder %s27, 1
      %p143 = por %p141, %p142
      %p145 = scmp.ne.s32.totalorder %s128, %s144
      %p146 = scmp.eq.s32.totalorder %s27, 0
      %p147 = por %p145, %p146
      %s148 = ssub.s32 %s28, %s47
      %s149 = ssub.s32 %s29, %s43
      %s150 = sor.u32 %s148, %s149
      %p151 = scmp.eq.s32.totalorder %s150, 0
      %s153 = sadd.s32 %s152, 1
      %s154 = scalar_select %p151, %s152, %s153
      %p157 = pneg %p151
      %p158 = scmp.eq.s32.totalorder %s21, 1
      %p159 = por %p157, %p158
      %p160 = scmp.ne.s32.totalorder %s152, %s155
      %p161 = scmp.eq.s32.totalorder %s21, 0
      %p162 = por %p160, %p161
      %p163 = scmp.ne.s32.totalorder %s152, %s155
      %p164 = scmp.eq.s32.totalorder %s26, 1
      %p165 = por %p163, %p164
      %p166 = scmp.ne.s32.totalorder %s155, %s156
      %p167 = scmp.eq.s32.totalorder %s26, 0
      %p168 = por %p166, %p167
      %p169 = scmp.ne.s32.totalorder %s155, %s156
      %p170 = scmp.eq.s32.totalorder %s27, 1
      %p171 = por %p169, %p170
      %p173 = scmp.ne.s32.totalorder %s156, %s172
      %p174 = scmp.eq.s32.totalorder %s27, 0
      %p175 = por %p173, %p174
      %p176 = scmp.le.s32.totalorder 1, %s21
      %p177 = scmp.lt.s32.totalorder %s21, 3
      %p178 = pnand %p176, %p177
      %p179 = pneg %p178
      // Predicated region
      $region9: #{tpu_custom_call.1} parent=5 // pred_check
        _
      $region10: #{tpu_custom_call.1} parent=5 // pred_check_branch
        %181 = sbr.rel (%p178) target = $region12
      $region11: #{tpu_custom_call.1} parent=5 // pred_region
        %s182 = ssub.s32 %s21, 1
        // Predicated region
        $region13: #{tpu_custom_call.1} parent=11 // pred_check
          %p183 = pneg %p91
        $region14: #{tpu_custom_call.1} parent=11 // pred_check_branch
          %185 = sbr.rel (%p183) target = $region16
        $region15: #{tpu_custom_call.1} parent=11 // pred_region
          %s187 = ssub.s32 512, 512
          %188 = vsyncadd [#allocation6], %s187
          %s189 = sshll.u32 [#allocation5], 4
          %s190 = int_to_ptr.vmem [resolvable:$true] %s189
          %195 = dma.hbm_to_vmem [thread:$0]  %s1, 512, %s190, [#allocation6], 128, 128, 8
        $region16: #{tpu_custom_call.1} parent=11 // pred_fallthru
          _
        // Predicated region
        $region17: #{tpu_custom_call.1} parent=11 // pred_check
          %p196 = pneg %p112
        $region18: #{tpu_custom_call.1} parent=11 // pred_check_branch
          %198 = sbr.rel (%p196) target = $region20
        $region19: #{tpu_custom_call.1} parent=11 // pred_region
          %s200 = ssub.s32 512, 512
          %201 = vsyncadd [#allocation6], %s200
          %s202 = sshll.u32 [#allocation7], 4
          %s203 = int_to_ptr.vmem [resolvable:$true] %s202
          %208 = dma.hbm_to_vmem [thread:$0]  %s2, 512, %s203, [#allocation6], 128, 128, 8
        $region20: #{tpu_custom_call.1} parent=11 // pred_fallthru
          _
      $region12: #{tpu_custom_call.1} parent=5 // pred_fallthru
        _
      %p209 = scmp.lt.s32.totalorder %s21, 2
      // Predicated region
      $region21: #{tpu_custom_call.1} parent=5 // pred_check
        %p210 = pneg %p209
      $region22: #{tpu_custom_call.1} parent=5 // pred_check_branch
        %212 = sbr.rel (%p210) target = $region24
      $region23: #{tpu_custom_call.1} parent=5 // pred_region
        // Predicated region
        $region25: #{tpu_custom_call.1} parent=23 // pred_check
          %p213 = pneg %p64
        $region26: #{tpu_custom_call.1} parent=23 // pred_check_branch
          %215 = sbr.rel (%p213) target = $region28
        $region27: #{tpu_custom_call.1} parent=23 // pred_region
          %s216 = sand.u32 %s54, 1
          %s217 = scalar_lea.sflag [#allocation3], %s216
          %s218 = sand.u32 %s54, 1
          %s219 = smul.addr %s218, 8
          %s220 = scalar_lea.vmem [#allocation2], %s219
          %s221 = sadd.s32 %s29, %s30
          %s223 = ssub.s32 128, 128
          %224 = vsyncadd %s217, %s223
          %s225 = sadd.s32 %s221, %s28
          %s226 = smul.addr %s225, 128
          %s227 = scalar_lea.hbm %s0, %s226
          %s229 = sshll.u32 %s220, 4
          %s230 = int_to_ptr.vmem [resolvable:$true] %s229
          %232 = dma.hbm_to_vmem [thread:$0]  %s227, 128, %s230, %s217
        $region28: #{tpu_custom_call.1} parent=23 // pred_fallthru
          _
      $region24: #{tpu_custom_call.1} parent=5 // pred_fallthru
        _
      %p233 = scmp.le.s32.totalorder 1, %s21
      %p234 = scmp.lt.s32.totalorder %s21, 3
      %p235 = pnand %p233, %p234
      %p236 = pneg %p235
      // Predicated region
      $region29: #{tpu_custom_call.1} parent=5 // pred_check
        _
      $region30: #{tpu_custom_call.1} parent=5 // pred_check_branch
        %238 = sbr.rel (%p235) target = $region32
      $region31: #{tpu_custom_call.1} parent=5 // pred_region
        %s239 = ssub.s32 %s21, 1
        %s240 = sand.u32 %s57, 1
        %s241 = scalar_lea.sflag [#allocation3], %s240
        %s242 = sand.u32 %s57, 1
        %s243 = smul.addr %s242, 8
        %s244 = scalar_lea.vmem [#allocation2], %s243
        // Predicated region
        $region33: #{tpu_custom_call.1} parent=31 // pred_check
          %p245 = pneg %p70
        $region34: #{tpu_custom_call.1} parent=31 // pred_check_branch
          %247 = sbr.rel (%p245) target = $region36
        $region35: #{tpu_custom_call.1} parent=31 // pred_region
          %248 = dma.done %s241, 128
        $region36: #{tpu_custom_call.1} parent=31 // pred_fallthru
          _
        // Predicated region
        $region37: #{tpu_custom_call.1} parent=31 // pred_check
          %p249 = pneg %p91
        $region38: #{tpu_custom_call.1} parent=31 // pred_check_branch
          %251 = sbr.rel (%p249) target = $region40
        $region39: #{tpu_custom_call.1} parent=31 // pred_region
          %252 = dma.done [#allocation6], 512
        $region40: #{tpu_custom_call.1} parent=31 // pred_fallthru
          _
        // Predicated region
        $region41: #{tpu_custom_call.1} parent=31 // pred_check
          %p253 = pneg %p112
        $region42: #{tpu_custom_call.1} parent=31 // pred_check_branch
          %255 = sbr.rel (%p253) target = $region44
        $region43: #{tpu_custom_call.1} parent=31 // pred_region
          %256 = dma.done [#allocation6], 512
        $region44: #{tpu_custom_call.1} parent=31 // pred_fallthru
          _
        %s257 = sand.u32 %s57, 1
        %s258 = scalar_lea.sflag [#allocation3], %s257
        %s259 = sand.u32 %s57, 1
        %s260 = smul.addr %s259, 8
        %s261 = scalar_lea.vmem [#allocation2], %s260
        %p262 = pneg %p70
        %p263 = pneg %p67
        %p264 = pneg %p91
        %p265 = pneg %p88
        %p266 = pneg %p112
        %p267 = pneg %p109
        %p268 = pneg %p140
        %p269 = pneg %p137
        %s270 = sand.u32 %s127, 1
        %s271 = scalar_lea.sflag [#allocation4], %s270
        %s272 = sand.u32 %s127, 1
        %s273 = smul.addr %s272, 32
        %s274 = scalar_lea.vmem [#allocation8], %s273
        %p275 = pneg %p168
        %p276 = pneg %p165
        %s277 = sand.u32 %s155, 1
        %s278 = scalar_lea.sflag [#allocation10], %s277
        %s279 = sand.u32 %s155, 1
        %s280 = scalar_lea.vmem [#allocation9], %s279
        %s281 = sadd.s32 %s32, %s33
        %p282 = scmp.eq.s32.totalorder %s33, 0
        // Predicated region
        $region45: #{tpu_custom_call.1} parent=31 // pred_check
          %p283 = pneg %p282
        $region46: #{tpu_custom_call.1} parent=31 // pred_check_branch
          %285 = sbr.rel (%p283) target = $region48
        $region47: #{tpu_custom_call.1} parent=31 // pred_region
          %vm286 = vcmask 261120
          %287 = vst.msk [vmem:[%s274] sm:$0xff] %vm286, 0.0
          %288 = vst.msk [vmem:[%s274 + $0x8] sm:$0xff] %vm286, 0.0
          %289 = vst.msk [vmem:[%s274 + $0x10] sm:$0xff] %vm286, 0.0
          %290 = vst.msk [vmem:[%s274 + $0x18] sm:$0xff] %vm286, 0.0
          %vm291 = vcmask 253952
          %292 = vst.msk [vmem:[%s280] sm:$0x1] %vm291, 0.0
        $region48: #{tpu_custom_call.1} parent=31 // pred_fallthru
          _
        %v293 = vld [vmem:[%s244] sm:$0xff]
        %v294 = vld [vmem:[#allocation5] sm:$0xff]
        %v295 = vld [vmem:[#allocation5 + $0x8] sm:$0xff]
        %v296 = vld [vmem:[#allocation5 + $0x10] sm:$0xff]
        %v297 = vld [vmem:[#allocation5 + $0x18] sm:$0xff]
        %vm298 = vcmask 261120
        %v300 = vsel %vm298, %v293, 0
        %302 = vmatprep.subr.mxu0 0.0
        %303 = vmatpush1.msra.mxu0 %v294
        %304 = vmatprep.subr.mxu0 0.0
        %305 = vmatpush1.msra.mxu0 %v295
        %306 = vmatprep.subr.mxu0 0.0
        %307 = vmatpush1.msra.mxu0 %v296
        %308 = vmatprep.subr.mxu0 0.0
        %309 = vmatpush1.msra.mxu0 %v297
        %310 = vmatprep.subr.mxu0 0.0
        %311 = vmatpush1.msra.mxu0 0.0
        %312 = vmatprep.subr.mxu0 0.0
        %313 = vmatpush1.msra.mxu0 0.0
        %314 = vmatprep.subr.mxu0 0.0
        %315 = vmatpush1.msra.mxu0 0.0
        %316 = vmatprep.subr.mxu0 0.0
        %317 = vmatpush1.msra.mxu0 0.0
        %318 = vmatprep.subr.mxu0 0.0
        %319 = vmatpush1.msra.mxu0 0.0
        %320 = vmatprep.subr.mxu0 0.0
        %321 = vmatpush1.msra.mxu0 0.0
        %322 = vmatprep.subr.mxu0 0.0
        %323 = vmatpush1.msra.mxu0 0.0
        %324 = vmatprep.subr.mxu0 0.0
        %325 = vmatpush1.msra.mxu0 0.0
        %326 = vmatprep.subr.mxu0 0.0
        %327 = vmatpush1.msra.mxu0 0.0
        %328 = vmatprep.subr.mxu0 0.0
        %329 = vmatpush1.msra.mxu0 0.0
        %330 = vmatprep.subr.mxu0 0.0
        %331 = vmatpush1.msra.mxu0 0.0
        %332 = vmatprep.subr.mxu0 0.0
        %333 = vmatpush1.msra.mxu0 0.0
        %334 = vmatprep.subr.mxu0 0.0
        %335 = vmatpush1.msra.mxu0 0.0
        %336 = vmatprep.subr.mxu0 0.0
        %337 = vmatpush1.msra.mxu0 0.0
        %338 = vmatprep.subr.mxu0 0.0
        %339 = vmatpush1.msra.mxu0 0.0
        %340 = vmatprep.subr.mxu0 0.0
        %341 = vmatpush1.msra.mxu0 0.0
        %342 = vmatprep.subr.mxu0 0.0
        %343 = vmatpush1.msra.mxu0 0.0
        %344 = vmatprep.subr.mxu0 0.0
        %345 = vmatpush1.msra.mxu0 0.0
        %346 = vmatprep.subr.mxu0 0.0
        %347 = vmatpush1.msra.mxu0 0.0
        %348 = vmatprep.subr.mxu0 0.0
        %349 = vmatpush1.msra.mxu0 0.0
        %350 = vmatprep.subr.mxu0 0.0
        %351 = vmatpush1.msra.mxu0 0.0
        %352 = vmatprep.subr.mxu0 0.0
        %353 = vmatpush1.msra.mxu0 0.0
        %354 = vmatprep.subr.mxu0 0.0
        %355 = vmatpush1.msra.mxu0 0.0
        %356 = vmatprep.subr.mxu0 0.0
        %357 = vmatpush1.msra.mxu0 0.0
        %358 = vmatprep.subr.mxu0 0.0
        %359 = vmatpush1.msra.mxu0 0.0
        %360 = vmatprep.subr.mxu0 0.0
        %361 = vmatpush1.msra.mxu0 0.0
        %362 = vmatprep.subr.mxu0 0.0
        %363 = vmatpush1.msra.mxu0 0.0
        %364 = vmatprep.subr.mxu0 0.0
        %365 = vmatpush1.msra.mxu0 0.0
        %366 = vmatprep.mubr.f32.mxu0 0.0
        %367 = vmatmul.mubr.f32.gmra.mrb[0].mxu0 %v300
        %v368 = vpop.f32.mrb[0].mxu0
        %v369 = vadd.f32 0.0, %v368
        %v370 = vpop.f32.mrb[0].mxu0
        %371 = vdwg.mxu0
        %v372 = vld [vmem:[#allocation7] sm:$0xff]
        %v373 = vld [vmem:[#allocation7 + $0x8] sm:$0xff]
        %v374 = vld [vmem:[#allocation7 + $0x10] sm:$0xff]
        %v375 = vld [vmem:[#allocation7 + $0x18] sm:$0xff]
        %376 = vmatprep.subr.mxu0 0.0
        %377 = vmatpush1.msra.mxu0 %v372
        %378 = vmatprep.subr.mxu0 0.0
        %379 = vmatpush1.msra.mxu0 %v373
        %380 = vmatprep.subr.mxu0 0.0
        %381 = vmatpush1.msra.mxu0 %v374
        %382 = vmatprep.subr.mxu0 0.0
        %383 = vmatpush1.msra.mxu0 %v375
        %384 = vmatprep.subr.mxu0 0.0
        %385 = vmatpush1.msra.mxu0 0.0
        %386 = vmatprep.subr.mxu0 0.0
        %387 = vmatpush1.msra.mxu0 0.0
        %388 = vmatprep.subr.mxu0 0.0
        %389 = vmatpush1.msra.mxu0 0.0
        %390 = vmatprep.subr.mxu0 0.0
        %391 = vmatpush1.msra.mxu0 0.0
        %392 = vmatprep.subr.mxu0 0.0
        %393 = vmatpush1.msra.mxu0 0.0
        %394 = vmatprep.subr.mxu0 0.0
        %395 = vmatpush1.msra.mxu0 0.0
        %396 = vmatprep.subr.mxu0 0.0
        %397 = vmatpush1.msra.mxu0 0.0
        %398 = vmatprep.subr.mxu0 0.0
        %399 = vmatpush1.msra.mxu0 0.0
        %400 = vmatprep.subr.mxu0 0.0
        %401 = vmatpush1.msra.mxu0 0.0
        %402 = vmatprep.subr.mxu0 0.0
        %403 = vmatpush1.msra.mxu0 0.0
        %404 = vmatprep.subr.mxu0 0.0
        %405 = vmatpush1.msra.mxu0 0.0
        %406 = vmatprep.subr.mxu0 0.0
        %407 = vmatpush1.msra.mxu0 0.0
        %408 = vmatprep.subr.mxu0 0.0
        %409 = vmatpush1.msra.mxu0 0.0
        %410 = vmatprep.subr.mxu0 0.0
        %411 = vmatpush1.msra.mxu0 0.0
        %412 = vmatprep.subr.mxu0 0.0
        %413 = vmatpush1.msra.mxu0 0.0
        %414 = vmatprep.subr.mxu0 0.0
        %415 = vmatpush1.msra.mxu0 0.0
        %416 = vmatprep.subr.mxu0 0.0
        %417 = vmatpush1.msra.mxu0 0.0
        %418 = vmatprep.subr.mxu0 0.0
        %419 = vmatpush1.msra.mxu0 0.0
        %420 = vmatprep.subr.mxu0 0.0
        %421 = vmatpush1.msra.mxu0 0.0
        %422 = vmatprep.subr.mxu0 0.0
        %423 = vmatpush1.msra.mxu0 0.0
        %424 = vmatprep.subr.mxu0 0.0
        %425 = vmatpush1.msra.mxu0 0.0
        %426 = vmatprep.subr.mxu0 0.0
        %427 = vmatpush1.msra.mxu0 0.0
        %428 = vmatprep.subr.mxu0 0.0
        %429 = vmatpush1.msra.mxu0 0.0
        %430 = vmatprep.subr.mxu0 0.0
        %431 = vmatpush1.msra.mxu0 0.0
        %432 = vmatprep.subr.mxu0 0.0
        %433 = vmatpush1.msra.mxu0 0.0
        %434 = vmatprep.subr.mxu0 0.0
        %435 = vmatpush1.msra.mxu0 0.0
        %436 = vmatprep.subr.mxu0 0.0
        %437 = vmatpush1.msra.mxu0 0.0
        %438 = vmatprep.subr.mxu0 0.0
        %439 = vmatpush1.msra.mxu0 0.0
        %440 = vmatprep.mubr.f32.mxu0 0.0
        %441 = vmatmul.mubr.f32.gmra.mrb[0].mxu0 %v300
        %v442 = vpop.f32.mrb[0].mxu0
        %v443 = vadd.f32 0.0, %v442
        %v444 = vpop.f32.mrb[0].mxu0
        %445 = vdwg.mxu0
        %vm446 = vcmp.gt.f32.partialorder %v369, 0.0
        %v447 = vadd.f32 %v369, 1.0
        %v448 = vmul.f32 %v369, 1.442695
        %v449 = vpow.pop %v448
        %v450 = vsel %vm446, %v447, %v449
        %v451 = vld [vmem:[%s274] sm:$0xff]
        %v452 = vld [vmem:[%s274 + $0x8] sm:$0xff]
        %v453 = vld [vmem:[%s274 + $0x10] sm:$0xff]
        %v454 = vld [vmem:[%s274 + $0x18] sm:$0xff]
        %455 = vxpose.xlu0.b32.start [1/16] %v450, 128
        %456 = vxpose.xlu0.b32.cont [2/16] 0.0, 128
        %457 = vxpose.xlu0.b32.cont [3/16] 0.0, 128
        %458 = vxpose.xlu0.b32.cont [4/16] 0.0, 128
        %459 = vxpose.xlu0.b32.cont [5/16] 0.0, 128
        %460 = vxpose.xlu0.b32.cont [6/16] 0.0, 128
        %461 = vxpose.xlu0.b32.cont [7/16] 0.0, 128
        %462 = vxpose.xlu0.b32.cont [8/16] 0.0, 128
        %463 = vxpose.xlu0.b32.cont [9/16] 0.0, 128
        %464 = vxpose.xlu0.b32.cont [10/16] 0.0, 128
        %465 = vxpose.xlu0.b32.cont [11/16] 0.0, 128
        %466 = vxpose.xlu0.b32.cont [12/16] 0.0, 128
        %467 = vxpose.xlu0.b32.cont [13/16] 0.0, 128
        %468 = vxpose.xlu0.b32.cont [14/16] 0.0, 128
        %469 = vxpose.xlu0.b32.cont [15/16] 0.0, 128
        %470 = vxpose.xlu0.b32.end [16/16] 0.0, 128
        %v471 = vpop.trf.xlu0
        %v472 = vpop.trf.xlu0
        %v473 = vpop.trf.xlu0
        %v474 = vpop.trf.xlu0
        %v475 = vpop.trf.xlu0
        %v476 = vpop.trf.xlu0
        %v477 = vpop.trf.xlu0
        %v478 = vpop.trf.xlu0
        %v479 = vpop.trf.xlu0
        %v480 = vpop.trf.xlu0
        %v481 = vpop.trf.xlu0
        %v482 = vpop.trf.xlu0
        %v483 = vpop.trf.xlu0
        %v484 = vpop.trf.xlu0
        %v485 = vpop.trf.xlu0
        %v486 = vpop.trf.xlu0
        %vm487 = vcmask 64512
        %v489 = vsel %vm487, %v471, 0
        %v492 = vsel %vm487, %v472, 0
        %v495 = vsel %vm487, %v473, 0
        %v498 = vsel %vm487, %v474, 0
        %500 = vmatprep.subr.mxu0 0.0
        %501 = vmatpush1.msra.mxu0 %v443
        %502 = vmatprep.subr.mxu0 0.0
        %503 = vmatpush1.msra.mxu0 0.0
        %504 = vmatprep.subr.mxu0 0.0
        %505 = vmatpush1.msra.mxu0 0.0
        %506 = vmatprep.subr.mxu0 0.0
        %507 = vmatpush1.msra.mxu0 0.0
        %508 = vmatprep.subr.mxu0 0.0
        %509 = vmatpush1.msra.mxu0 0.0
        %510 = vmatprep.subr.mxu0 0.0
        %511 = vmatpush1.msra.mxu0 0.0
        %512 = vmatprep.subr.mxu0 0.0
        %513 = vmatpush1.msra.mxu0 0.0
        %514 = vmatprep.subr.mxu0 0.0
        %515 = vmatpush1.msra.mxu0 0.0
        %516 = vmatprep.subr.mxu0 0.0
        %517 = vmatpush1.msra.mxu0 0.0
        %518 = vmatprep.subr.mxu0 0.0
        %519 = vmatpush1.msra.mxu0 0.0
        %520 = vmatprep.subr.mxu0 0.0
        %521 = vmatpush1.msra.mxu0 0.0
        %522 = vmatprep.subr.mxu0 0.0
        %523 = vmatpush1.msra.mxu0 0.0
        %524 = vmatprep.subr.mxu0 0.0
        %525 = vmatpush1.msra.mxu0 0.0
        %526 = vmatprep.subr.mxu0 0.0
        %527 = vmatpush1.msra.mxu0 0.0
        %528 = vmatprep.subr.mxu0 0.0
        %529 = vmatpush1.msra.mxu0 0.0
        %530 = vmatprep.subr.mxu0 0.0
        %531 = vmatpush1.msra.mxu0 0.0
        %532 = vmatprep.subr.mxu0 0.0
        %533 = vmatpush1.msra.mxu0 0.0
        %534 = vmatprep.subr.mxu0 0.0
        %535 = vmatpush1.msra.mxu0 0.0
        %536 = vmatprep.subr.mxu0 0.0
        %537 = vmatpush1.msra.mxu0 0.0
        %538 = vmatprep.subr.mxu0 0.0
        %539 = vmatpush1.msra.mxu0 0.0
        %540 = vmatprep.subr.mxu0 0.0
        %541 = vmatpush1.msra.mxu0 0.0
        %542 = vmatprep.subr.mxu0 0.0
        %543 = vmatpush1.msra.mxu0 0.0
        %544 = vmatprep.subr.mxu0 0.0
        %545 = vmatpush1.msra.mxu0 0.0
        %546 = vmatprep.subr.mxu0 0.0
        %547 = vmatpush1.msra.mxu0 0.0
        %548 = vmatprep.subr.mxu0 0.0
        %549 = vmatpush1.msra.mxu0 0.0
        %550 = vmatprep.subr.mxu0 0.0
        %551 = vmatpush1.msra.mxu0 0.0
        %552 = vmatprep.subr.mxu0 0.0
        %553 = vmatpush1.msra.mxu0 0.0
        %554 = vmatprep.subr.mxu0 0.0
        %555 = vmatpush1.msra.mxu0 0.0
        %556 = vmatprep.subr.mxu0 0.0
        %557 = vmatpush1.msra.mxu0 0.0
        %558 = vmatprep.subr.mxu0 0.0
        %559 = vmatpush1.msra.mxu0 0.0
        %560 = vmatprep.subr.mxu0 0.0
        %561 = vmatpush1.msra.mxu0 0.0
        %562 = vmatprep.subr.mxu0 0.0
        %563 = vmatpush1.msra.mxu0 0.0
        %564 = vmatprep.mubr.f32.mxu0 0.0
        %565 = vmatmul.mubr.f32.gmra.mrb[0].mxu0 %v489
        %v566 = vpop.f32.mrb[0].mxu0
        %v567 = vadd.f32 0.0, %v566
        %v568 = vpop.f32.mrb[0].mxu0
        %569 = vmatprep.mubr.f32.mxu0 0.0
        %570 = vmatmul.mubr.f32.gmra.mrb[0].mxu0 %v492
        %v571 = vpop.f32.mrb[0].mxu0
        %v572 = vadd.f32 0.0, %v571
        %v573 = vpop.f32.mrb[0].mxu0
        %574 = vmatprep.mubr.f32.mxu0 0.0
        %575 = vmatmul.mubr.f32.gmra.mrb[0].mxu0 %v495
        %v576 = vpop.f32.mrb[0].mxu0
        %v577 = vadd.f32 0.0, %v576
        %v578 = vpop.f32.mrb[0].mxu0
        %579 = vmatprep.mubr.f32.mxu0 0.0
        %580 = vmatmul.mubr.f32.gmra.mrb[0].mxu0 %v498
        %v581 = vpop.f32.mrb[0].mxu0
        %v582 = vadd.f32 0.0, %v581
        %v583 = vpop.f32.mrb[0].mxu0
        %584 = vdwg.mxu0
        %v585 = vadd.f32 %v451, %v567
        %v586 = vadd.f32 %v452, %v572
        %v587 = vadd.f32 %v453, %v577
        %v588 = vadd.f32 %v454, %v582
        %589 = vst.msk [vmem:[%s274] sm:$0xff] %vm298, %v585
        %590 = vst.msk [vmem:[%s274 + $0x8] sm:$0xff] %vm298, %v586
        %591 = vst.msk [vmem:[%s274 + $0x10] sm:$0xff] %vm298, %v587
        %592 = vst.msk [vmem:[%s274 + $0x18] sm:$0xff] %vm298, %v588
        %v593 = vld [vmem:[%s280] sm:$0x1]
        %v594 = vsel %vm298, %v450, 0.0
        %v595 = vrot.slane %v594, 4
        %v596 = vadd.f32 %v594, %v595
        %v597 = vrot.slane %v596, 2
        %v598 = vadd.f32 %v596, %v597
        %v599 = vrot.slane %v598, 1
        %v600 = vadd.f32 %v598, %v599
        %v601 = vadd.f32 %v593, %v600
        %vm602 = vcmask 253952
        %603 = vst.msk [vmem:[%s280] sm:$0x1] %vm602, %v601
        %s604 = sand.u32 %s127, 1
        %s605 = scalar_lea.sflag [#allocation4], %s604
        %s606 = sand.u32 %s127, 1
        %s607 = smul.addr %s606, 32
        %s608 = scalar_lea.vmem [#allocation8], %s607
        %s609 = sand.u32 %s155, 1
        %s610 = scalar_lea.sflag [#allocation10], %s609
        %s611 = sand.u32 %s155, 1
        %s612 = scalar_lea.vmem [#allocation9], %s611
        // Predicated region
        $region49: #{tpu_custom_call.1} parent=31 // pred_check
          %p613 = pneg %p137
        $region50: #{tpu_custom_call.1} parent=31 // pred_check_branch
          %615 = sbr.rel (%p613) target = $region52
        $region51: #{tpu_custom_call.1} parent=31 // pred_region
          %s617 = ssub.s32 512, 512
          %618 = vsyncadd %s605, %s617
          %s619 = smul.addr %s32, 4
          %s620 = smul.addr %s31, 4
          %s621 = sadd.s32 %s619, %s620
          %s622 = smul.addr %s621, 128
          %s623 = scalar_lea.hbm %s3, %s622
          %s624 = sshll.u32 %s608, 4
          %s625 = int_to_ptr.vmem [resolvable:$true] %s624
          %630 = dma.vmem_to_hbm [thread:$0]  %s625, 512, %s623, %s605, 128, 128, 8
        $region52: #{tpu_custom_call.1} parent=31 // pred_fallthru
          _
        // Predicated region
        $region53: #{tpu_custom_call.1} parent=31 // pred_check
          %p631 = pneg %p165
        $region54: #{tpu_custom_call.1} parent=31 // pred_check_branch
          %633 = sbr.rel (%p631) target = $region56
        $region55: #{tpu_custom_call.1} parent=31 // pred_region
          %s635 = ssub.s32 16, 16
          %636 = vsyncadd %s610, %s635
          %s637 = sadd.s32 %s32, %s31
          %s638 = smul.addr %s637, 16
          %s639 = scalar_lea.hbm %s4, %s638
          %s641 = sshll.u32 %s612, 4
          %s642 = int_to_ptr.vmem [resolvable:$true] %s641
          %644 = dma.vmem_to_hbm [thread:$0]  %s642, 16, %s639, %s610
        $region56: #{tpu_custom_call.1} parent=31 // pred_fallthru
          _
      $region32: #{tpu_custom_call.1} parent=5 // pred_fallthru
        _
      %p645 = scmp.le.s32.totalorder 2, %s21
      // Predicated region
      $region57: #{tpu_custom_call.1} parent=5 // pred_check
        %p646 = pneg %p645
      $region58: #{tpu_custom_call.1} parent=5 // pred_check_branch
        %648 = sbr.rel (%p646) target = $region60
      $region59: #{tpu_custom_call.1} parent=5 // pred_region
        %s649 = ssub.s32 %s21, 2
        // Predicated region
        $region61: #{tpu_custom_call.1} parent=59 // pred_check
          %p650 = pneg %p143
        $region62: #{tpu_custom_call.1} parent=59 // pred_check_branch
          %652 = sbr.rel (%p650) target = $region64
        $region63: #{tpu_custom_call.1} parent=59 // pred_region
          %s653 = sand.u32 %s128, 1
          %s654 = scalar_lea.sflag [#allocation4], %s653
          %s655 = sand.u32 %s128, 1
          %s656 = smul.addr %s655, 32
          %s657 = scalar_lea.vmem [#allocation8], %s656
          %658 = dma.done %s654, 512
        $region64: #{tpu_custom_call.1} parent=59 // pred_fallthru
          _
        // Predicated region
        $region65: #{tpu_custom_call.1} parent=59 // pred_check
          %p659 = pneg %p171
        $region66: #{tpu_custom_call.1} parent=59 // pred_check_branch
          %661 = sbr.rel (%p659) target = $region68
        $region67: #{tpu_custom_call.1} parent=59 // pred_region
          %s662 = sand.u32 %s156, 1
          %s663 = scalar_lea.sflag [#allocation10], %s662
          %s664 = sand.u32 %s156, 1
          %s665 = scalar_lea.vmem [#allocation9], %s664
          %666 = dma.done %s663, 16
        $region68: #{tpu_custom_call.1} parent=59 // pred_fallthru
          _
      $region60: #{tpu_custom_call.1} parent=5 // pred_fallthru
        _
    $region6: #{tpu_custom_call.1} parent=1 // loop_footer
      %s25 = sadd.s32 1, %s21
    $region7: #{tpu_custom_call.1} parent=1 // loop_footer_branch
      %20 = sbr.rel target = $region3
    $region8: #{tpu_custom_call.1} parent=1 // loop_exit
      _
    %667 = vsyncpa [#allocation3], 1
    %s668 = scalar_lea.sflag [#allocation3], 1
    %669 = vsyncpa %s668, 1
    %670 = vsyncpa [#allocation6], 1
    %671 = vsyncpa [#allocation4], 1
    %s672 = scalar_lea.sflag [#allocation4], 1
    %673 = vsyncpa %s672, 1
    %674 = vsyncpa [#allocation10], 1
    %s675 = scalar_lea.sflag [#allocation10], 1
    %676 = vsyncpa %s675, 1

</llo_original>
